<compile_context>
chip_gen: v6e
topology: v6e:2x2x1
jax: 0.10.0
libtpu: 0.0.40
codegen_flags: <defaults>
</compile_context>

<pallas_src>
import jax
import jax.numpy as jnp
from jax.experimental import pallas as pl
from jax.experimental.pallas import tpu as pltpu


def _active_embed_kernel(x_ref, w_ref, b_ref, o_ref):
    # x_ref: (T, P)    packed per-token scalars (P tokens per output row)
    # w_ref: (P, P*E)  block-diagonal expanded conv weight
    # b_ref: (1, P*E)  bias tiled P times
    # o_ref: (T, P*E)  lane-dense output rows (P*E is a multiple of 128 when packed)
    x = x_ref[...]
    w = w_ref[...]
    b = b_ref[...]
    P = x.shape[1]

    # acc[r, p*E + e] = x[r, p] * w_vec[e]
    # Pure VPU: column -> lane splat + FMA, statically unrolled over the small pack
    # factor (P = 2 by default). The bias add broadcasts over sublanes.
    acc = x[:, 0:1] * w[0:1, :]
    for p in range(1, P):
        acc = acc + x[:, p:p + 1] * w[p:p + 1, :]

    # sin is EUP/VALU filler; the binding resource here is the output store/DMA path.
    o_ref[...] = jnp.sin(acc + b).astype(o_ref.dtype)


def active_embed(x_ncl, weight, bias, *, block_rows=2048, out_dtype=jnp.float32):
    """ActiveEmbed forward.

    x_ncl:  (B, 1, L) float  (NCL layout, single input channel)
    weight: (E, 1, 1) Conv1d(1, E, kernel_size=1) weight
    bias:   (E,)
    Returns (B, L, E) in `out_dtype` (float32 by default; jnp.bfloat16 halves the HBM
    writeback on v6e/v7x if the consumer tolerates it).
    """
    B, C, L = x_ncl.shape
    assert C == 1, "ActiveEmbed expects a single input channel"
    assert block_rows % 8 == 0, "block_rows must be a multiple of 8 sublanes"
    E = int(weight.shape[0])

    w_vec = weight.reshape(E).astype(jnp.float32)
    b_vec = bias.reshape(E).astype(jnp.float32)

    # Pack P tokens per output row so the stored row width is a multiple of 128 lanes
    # (P = 2 for the default E = 64). Falls back to P = 1 for other embed dims
    # (still correct; stores are lane-masked when E is not a multiple of 128).
    P = 128 // E if (E < 128 and 128 % E == 0) else 1
    LW = P * E

    N = B * L                                # total tokens
    rows_needed = pl.cdiv(N, P)              # packed rows holding real data

    # Packed-row tile: multiple of 8 sublanes, capped at block_rows; pad rows to a
    # whole number of tiles (padding is zeros, discarded after the call).
    tile_rows = max(8, min(block_rows, pl.cdiv(rows_needed, 8) * 8))
    rows_pad = pl.cdiv(rows_needed, tile_rows) * tile_rows
    n_pad_tokens = rows_pad * P

    x_flat = x_ncl.reshape(N).astype(jnp.float32)
    if n_pad_tokens != N:
        x_flat = jnp.pad(x_flat, (0, n_pad_tokens - N))
    x_rows = x_flat.reshape(rows_pad, P)

    # Block-diagonal weight expansion: w_big[p, q*E + e] = (p == q) * w[e]
    eye = jnp.eye(P, dtype=jnp.float32)
    w_big = (eye[:, :, None] * w_vec[None, None, :]).reshape(P, LW)
    b_big = jnp.tile(b_vec, (P,)).reshape(1, LW)

    grid = (rows_pad // tile_rows,)

    out = pl.pallas_call(
        _active_embed_kernel,
        out_shape=jax.ShapeDtypeStruct((rows_pad, LW), out_dtype),
        grid_spec=pl.GridSpec(
            grid=grid,
            in_specs=[
                pl.BlockSpec((tile_rows, P), lambda i: (i, 0)),
                pl.BlockSpec((P, LW), lambda i: (0, 0)),
                pl.BlockSpec((1, LW), lambda i: (0, 0)),
            ],
            out_specs=pl.BlockSpec((tile_rows, LW), lambda i: (i, 0)),
        ),
        compiler_params=pltpu.CompilerParams(
            # Tiles are independent: shard across v7x's two TensorCores.
            dimension_semantics=("parallel",),
        ),
    )(x_rows, w_big, b_big)

    # Free reshape: row-major (rows_pad, P*E) == (rows_pad*P, E); drop padding tokens.
    out = out.reshape(rows_pad * P, E)[:N].reshape(B, L, E)
    return out


def active_embed_ref(x_ncl, weight, bias):
    # Pure-JAX reference matching the PyTorch module (Conv1d k=1 -> sin -> transpose).
    E = weight.shape[0]
    w = weight.reshape(E)
    b = bias.reshape(E)
    y = x_ncl[:, 0, :, None] * w[None, None, :] + b[None, None, :]   # (B, L, E)
    return jnp.sin(y)


if __name__ == "__main__":
    # Module defaults: rec_len=25, embed_dim=64; small batch.
    B, L, E = 2, 25, 64

    key = jax.random.PRNGKey(0)
    kx, kw, kb = jax.random.split(key, 3)

    # PyTorch Conv1d default init: U(-sqrt(k), sqrt(k)) with k = 1/(in_ch*kernel) = 1.
    weight = jax.random.uniform(kw, (E, 1, 1), jnp.float32, minval=-1.0, maxval=1.0)
    bias = jax.random.uniform(kb, (E,), jnp.float32, minval=-1.0, maxval=1.0)
    x = jax.random.normal(kx, (B, 1, L), jnp.float32)

    out = jax.block_until_ready(active_embed(x, weight, bias))
    ref = active_embed_ref(x, weight, bias)
    assert out.shape == (B, L, E), out.shape
    assert jnp.allclose(out, ref, atol=1e-5, rtol=1e-5), "mismatch vs reference"

    # Exercise the multi-tile (grid > 1) + padding path with a second small case.
    x2 = jax.random.normal(jax.random.PRNGKey(1), (4, 1, L), jnp.float32)
    out2 = jax.block_until_ready(active_embed(x2, weight, bias, block_rows=8))
    ref2 = active_embed_ref(x2, weight, bias)
    assert out2.shape == (4, L, E), out2.shape
    assert jnp.allclose(out2, ref2, atol=1e-5, rtol=1e-5), "mismatch vs reference (tiled)"

    print("KERNEL_OK")
</pallas_src>

<mosaic_0001>
module attributes {stable_mosaic.version = 11 : i64} {
  func.func @_active_embed_kernel(%arg0: i32, %arg1: memref<32x2xf32, #tpu.memory_space<vmem>>, %arg2: memref<2x128xf32, #tpu.memory_space<vmem>>, %arg3: memref<1x128xf32, #tpu.memory_space<vmem>>, %arg4: memref<32x128xf32, #tpu.memory_space<vmem>>) attributes {dimension_semantics = [#tpu.dimension_semantics<parallel>], iteration_bounds = array<i64: 1>, scalar_prefetch = 0 : i64, scratch_operands = 0 : i64, tpu.core_type = #tpu.core_type<tc>, window_params = [{transform_indices = @transform_0, window_bounds = array<i64: 32, 2>}, {pipeline_mode = #tpu.pipeline_mode<synchronous>, transform_indices = @transform_1, window_bounds = array<i64: 2, 128>}, {pipeline_mode = #tpu.pipeline_mode<synchronous>, transform_indices = @transform_2, window_bounds = array<i64: 1, 128>}, {transform_indices = @transform_3, window_bounds = array<i64: 32, 128>}]} {
    %c0 = arith.constant 0 : index
    %c0_0 = arith.constant 0 : index
    %0 = vector.load %arg1[%c0, %c0_0] : memref<32x2xf32, #tpu.memory_space<vmem>>, vector<32x2xf32>
    %c0_1 = arith.constant 0 : index
    %c0_2 = arith.constant 0 : index
    %1 = vector.load %arg2[%c0_1, %c0_2] : memref<2x128xf32, #tpu.memory_space<vmem>>, vector<2x128xf32>
    %c0_3 = arith.constant 0 : index
    %c0_4 = arith.constant 0 : index
    %2 = vector.load %arg3[%c0_3, %c0_4] : memref<1x128xf32, #tpu.memory_space<vmem>>, vector<1x128xf32>
    %3 = vector.extract_strided_slice %0 {offsets = [0, 0], sizes = [32, 1], strides = [1, 1]} : vector<32x2xf32> to vector<32x1xf32>
    %4 = vector.extract_strided_slice %1 {offsets = [0, 0], sizes = [1, 128], strides = [1, 1]} : vector<2x128xf32> to vector<1x128xf32>
    %5 = vector.broadcast %3 : vector<32x1xf32> to vector<32x128xf32>
    %6 = vector.broadcast %4 : vector<1x128xf32> to vector<32x128xf32>
    %7 = arith.mulf %5, %6 : vector<32x128xf32>
    %8 = vector.extract_strided_slice %0 {offsets = [0, 1], sizes = [32, 1], strides = [1, 1]} : vector<32x2xf32> to vector<32x1xf32>
    %9 = vector.extract_strided_slice %1 {offsets = [1, 0], sizes = [1, 128], strides = [1, 1]} : vector<2x128xf32> to vector<1x128xf32>
    %10 = vector.broadcast %8 : vector<32x1xf32> to vector<32x128xf32>
    %11 = vector.broadcast %9 : vector<1x128xf32> to vector<32x128xf32>
    %12 = arith.mulf %10, %11 : vector<32x128xf32>
    %13 = arith.addf %7, %12 : vector<32x128xf32>
    %14 = vector.broadcast %2 : vector<1x128xf32> to vector<32x128xf32>
    %15 = arith.addf %13, %14 : vector<32x128xf32>
    %16 = math.sin %15 : vector<32x128xf32>
    %c0_5 = arith.constant 0 : index
    %c0_6 = arith.constant 0 : index
    %17 = vector.load %arg4[%c0_5, %c0_6] : memref<32x128xf32, #tpu.memory_space<vmem>>, vector<32x128xf32>
    tpu.vector_store %arg4[%c0_5, %c0_6], %16 {strides = array<i32>} : memref<32x128xf32, #tpu.memory_space<vmem>>, vector<32x128xf32>,
    return
  }
  func.func @transform_0(%arg0: i32) -> (i32, i32) {
    %c0_i32 = arith.constant 0 : i32
    %c0_i32_0 = arith.constant 0 : i32
    return %arg0, %c0_i32 : i32, i32
  }
  func.func @transform_1(%arg0: i32) -> (i32, i32) {
    %c0_i32 = arith.constant 0 : i32
    %c0_i32_0 = arith.constant 0 : i32
    %c0_i32_1 = arith.constant 0 : i32
    return %c0_i32, %c0_i32_0 : i32, i32
  }
  func.func @transform_2(%arg0: i32) -> (i32, i32) {
    %c0_i32 = arith.constant 0 : i32
    %c0_i32_0 = arith.constant 0 : i32
    %c0_i32_1 = arith.constant 0 : i32
    return %c0_i32, %c0_i32_0 : i32, i32
  }
  func.func @transform_3(%arg0: i32) -> (i32, i32) {
    %c0_i32 = arith.constant 0 : i32
    %c0_i32_0 = arith.constant 0 : i32
    return %arg0, %c0_i32 : i32, i32
  }
}

</mosaic_0001>

<llo_original>
// kernel: tpu_custom_call.1
$region0: #{tpu_custom_call.1}
  #allocation0 [shape = 'u32[]', space=smem, size = 0x4, offset = 0x4, fixed_abs, tag = 'smem constant byte address 0x4 - core index']
  #allocation1 [shape = 'u32[144,128]{1,0:T(1,128)}', space=vmem, size = 0x12000, scoped, tag = 'internal scratch']
  %s0 = inlined_call_operand.vmem [shape: f32[32,2], index: 0, kind: input, shape index: {}]
  %s1 = inlined_call_operand.vmem [shape: f32[2,128], index: 1, kind: input, shape index: {}]
  %s2 = inlined_call_operand.vmem [shape: f32[1,128], index: 2, kind: input, shape index: {}]
  %s3 = inlined_call_operand.hbm [shape: f32[32,128], index: 3, kind: output, shape index: {}]
  %s4 = sld [smem:[#allocation0]]
  $region22: #{tpu_custom_call.1} parent=0
    _
  %s6 = ssub.s32 1, %s4
  %s7 = scalar_select 0, %s6, %s4
  $region1: #{tpu_custom_call.1} parent=0
    #allocation2 [shape = 'u8[16384]{0}', space=vmem, size = 0x4000, scoped, tag = 'output window, operand 0, single buffered']
    #allocation3 [shape = 's32[1]{0}', space=sflag, size = 0x4, scoped, tag = 'scoped memory for tpu_custom_call.1']
    %8 = vsyncpa [#allocation3], 0
    // Predicated region
    $region2: #{tpu_custom_call.1} parent=1 // pred_check
      _
    $region3: #{tpu_custom_call.1} parent=1 // pred_check_branch
      %10 = sbr.rel (0) target = $region5
    $region4: #{tpu_custom_call.1} parent=1 // pred_region
      _
    $region5: #{tpu_custom_call.1} parent=1 // pred_fallthru
      _
    // Predicated region
    $region6: #{tpu_custom_call.1} parent=1 // pred_check
      _
    $region7: #{tpu_custom_call.1} parent=1 // pred_check_branch
      %12 = sbr.rel (0) target = $region9
    $region8: #{tpu_custom_call.1} parent=1 // pred_region
      _
    $region9: #{tpu_custom_call.1} parent=1 // pred_fallthru
      _
    // Predicated region
    $region10: #{tpu_custom_call.1} parent=1 // pred_check
      _
    $region11: #{tpu_custom_call.1} parent=1 // pred_check_branch
      %14 = sbr.rel (0) target = $region13
    $region12: #{tpu_custom_call.1} parent=1 // pred_region
      _
    $region13: #{tpu_custom_call.1} parent=1 // pred_fallthru
      _
    %v15 = vld [vmem:[%s0] sm:$0xff]
    %v16 = vld [vmem:[%s0 + $0x8] sm:$0xff]
    %v17 = vld [vmem:[%s0 + $0x10] sm:$0xff]
    %v18 = vld [vmem:[%s0 + $0x18] sm:$0xff]
    %v19 = vld [vmem:[%s1] sm:$0x3]
    %v20 = vld [vmem:[%s2] sm:$0x1]
    %22 = vset.pattern.permute.xlu0 0
    %23 = vperm.xlu0 %22, %v15
    %v24 = vpop.permute.xlu0 %23
    %27 = vset.pattern.permute.xlu0 0
    %28 = vperm.xlu0 %27, %v16
    %v29 = vpop.permute.xlu0 %28
    %32 = vset.pattern.permute.xlu0 0
    %33 = vperm.xlu0 %32, %v17
    %v34 = vpop.permute.xlu0 %33
    %37 = vset.pattern.permute.xlu0 0
    %38 = vperm.xlu0 %37, %v18
    %v39 = vpop.permute.xlu0 %38
    %v41 = vlaneseq
    %v42 = vshrl.u32 %v41, 7
    %v43 = vsub.s32 0, %v42
    %v44 = vrot.slane %v19, %v43
    %v45 = vmul.f32 %v24, %v44
    %v46 = vmul.f32 %v29, %v44
    %v47 = vmul.f32 %v34, %v44
    %v48 = vmul.f32 %v39, %v44
    %49 = vset.pattern.permute.xlu0 1
    %50 = vperm.xlu0 %49, %v15
    %v51 = vpop.permute.xlu0 %50
    %53 = vset.pattern.permute.xlu0 1
    %54 = vperm.xlu0 %53, %v16
    %v55 = vpop.permute.xlu0 %54
    %57 = vset.pattern.permute.xlu0 1
    %58 = vperm.xlu0 %57, %v17
    %v59 = vpop.permute.xlu0 %58
    %61 = vset.pattern.permute.xlu0 1
    %62 = vperm.xlu0 %61, %v18
    %v63 = vpop.permute.xlu0 %62
    %v65 = vlaneseq
    %v66 = vshrl.u32 %v65, 7
    %v67 = vsub.s32 1, %v66
    %v68 = vrot.slane %v19, %v67
    %v69 = vmul.f32 %v51, %v68
    %v70 = vmul.f32 %v55, %v68
    %v71 = vmul.f32 %v59, %v68
    %v72 = vmul.f32 %v63, %v68
    %v73 = vadd.f32 %v45, %v69
    %v74 = vadd.f32 %v46, %v70
    %v75 = vadd.f32 %v47, %v71
    %v76 = vadd.f32 %v48, %v72
    %v78 = vlaneseq
    %v79 = vshrl.u32 %v78, 7
    %v80 = vsub.s32 0, %v79
    %v81 = vrot.slane %v20, %v80
    %v83 = vadd.f32 %v73, %v81
    %v84 = vadd.f32 %v74, %v81
    %v85 = vadd.f32 %v75, %v81
    %v86 = vadd.f32 %v76, %v81
    %v87 = vand.u32 2147483647, %v83
    %vm88 = vcmp.le.f32.partialorder %v87, 0.7853982
    %vm89 = vcmp.lt.s32.totalorder %v83, 0
    %v90 = vand.u32 %v83, 2139095040
    %v91 = vshrl.u32 %v90, 23
    %v92 = vsub.s32 %v91, 127
    %v93 = vand.u32 2147483647, %v83
    %v94 = vand.u32 %v93, 8388607
    %v95 = vor.u32 %v94, 8388608
    %v96 = vsub.s32 0, %v95
    %v97 = vadd.s32 %v92, 1
    %vm98 = vcmp.gt.s32.totalorder %v97, 0
    %v99 = vsel %vm98, %v97, 0
    %v100 = vshrl.u32 %v99, 5
    %v101 = vand.u32 %v99, 31
    %v102 = vsub.s32 32, %v101
    %v103 = vshrl.u32 683565275, %v102
    %v104 = vshll.u32 683565275, %v101
    %v105 = vshrl.u32 2475754826, %v102
    %v106 = vor.u32 %v104, %v105
    %v107 = vshll.u32 2475754826, %v101
    %v108 = vshrl.u32 2131351028, %v102
    %v109 = vor.u32 %v107, %v108
    %v110 = vshll.u32 2131351028, %v101
    %v111 = vshrl.u32 2102212464, %v102
    %v112 = vor.u32 %v110, %v111
    %v113 = vshll.u32 2102212464, %v101
    %v114 = vshrl.u32 920167782, %v102
    %v115 = vor.u32 %v113, %v114
    %v116 = vshll.u32 920167782, %v101
    %v117 = vshrl.u32 1326507024, %v102
    %v118 = vor.u32 %v116, %v117
    %vm119 = vcmp.lt.s32.totalorder %v100, 1
    %vm120 = vcmp.lt.s32.totalorder %v100, 2
    %vm121 = vcmp.lt.s32.totalorder %v100, 3
    %vm122 = vcmp.lt.s32.totalorder %v100, 4
    %v123 = vsel %vm119, %v103, %v106
    %v124 = vsel %vm122, %v112, 2102212464
    %v125 = vsel %vm121, %v109, %v124
    %v126 = vsel %vm120, %v123, %v125
    %v127 = vsel %vm119, %v106, %v109
    %v128 = vsel %vm122, %v115, 920167782
    %v129 = vsel %vm121, %v112, %v128
    %v130 = vsel %vm120, %v127, %v129
    %v131 = vsel %vm119, %v109, %v112
    %v132 = vsel %vm122, %v118, 1326507024
    %v133 = vsel %vm121, %v115, %v132
    %v134 = vsel %vm120, %v131, %v133
    %v135 = vshll.u32 %v95, 8
    %v136 = vmul.u32.u64.compose %v135, %v134
    %v137 = vextract.low.u32 %v136
    %v138 = vextract.high.u32 %v136
    %v139 = vmul.u32.u64.compose %v135, %v130
    %v140 = vextract.low.u32 %v139
    %v141 = vextract.high.u32 %v139
    %v142 = vmul.u32 %v135, %v126
    %v143 = vadd.s32 %v138, %v140
    %vm144 = vc.u32 %v138, %v140
    %v145 = vadd.s32 %v141, 1
    %v146 = vsel %vm144, %v145, %v141
    %v147 = vadd.s32 %v142, %v146
    %v148 = vadd.s32 %v147, 536870912
    %v149 = vshrl.u32 %v148, 30
    %v150 = vshll.u32 %v149, 30
    %v151 = vsub.s32 %v147, %v150
    %vm152 = vcmp.lt.s32.totalorder %v151, 0
    %v153 = vsub.s32 0, %v151
    %v154 = vsel %vm152, %v153, %v151
    %v155 = vclz %v154
    %v156 = vsub.s32 %v155, 2
    %vm157 = vcmp.gt.s32.totalorder 0, %v156
    %v158 = vsel %vm157, 0, %v156
    %v159 = vsub.s32 32, %v158
    %v160 = vshll.u32 %v151, %v158
    %v161 = vshrl.u32 %v143, %v159
    %v162 = vor.u32 %v160, %v161
    %v163 = vsub.s32 4294967266, %v158
    %v164 = vadd.s32 %v163, 127
    %v165 = vshll.u32 %v164, 23
    %v166 = vor.u32 4788187, %v165
    %v167 = vand.u32 2147483647, %v166
    %v169 = vcvt.s32.f32 %v162
    %v170 = vmul.f32 %v169, %v167
    %v171 = vxor.u32 %v170, 2147483648
    %v172 = vsel %vm89, %v171, %v170
    %v173 = vsub.s32 4, %v149
    %v174 = vsel %vm89, %v173, %v149
    %v175 = vsel %vm88, %v83, %v172
    %v176 = vsel %vm88, 0, %v174
    %v177 = vcosq.f32.pop %v175
    %v178 = vsinq.f32.pop %v175
    %vm179 = vweird.f32 %v83
    %v180 = vadd.s32 %v176, 3
    %v181 = vand.u32 %v180, 3
    %vm182 = vcmp.lt.s32.totalorder %v181, 2
    %vm183 = vcmp.eq.s32.totalorder %v181, 0
    %v184 = vxor.u32 %v178, 2147483648
    %v185 = vsel %vm183, %v177, %v184
    %vm186 = vcmp.eq.s32.totalorder %v181, 2
    %v187 = vxor.u32 %v177, 2147483648
    %v188 = vsel %vm186, %v187, %v178
    %v189 = vsel %vm182, %v185, %v188
    %v190 = vsel %vm179, nan, %v189
    %v191 = vand.u32 2147483647, %v84
    %vm192 = vcmp.le.f32.partialorder %v191, 0.7853982
    %vm193 = vcmp.lt.s32.totalorder %v84, 0
    %v194 = vand.u32 %v84, 2139095040
    %v195 = vshrl.u32 %v194, 23
    %v196 = vsub.s32 %v195, 127
    %v197 = vand.u32 2147483647, %v84
    %v198 = vand.u32 %v197, 8388607
    %v199 = vor.u32 %v198, 8388608
    %v200 = vsub.s32 0, %v199
    %v201 = vadd.s32 %v196, 1
    %vm202 = vcmp.gt.s32.totalorder %v201, 0
    %v203 = vsel %vm202, %v201, 0
    %v204 = vshrl.u32 %v203, 5
    %v205 = vand.u32 %v203, 31
    %v206 = vsub.s32 32, %v205
    %v207 = vshrl.u32 683565275, %v206
    %v208 = vshll.u32 683565275, %v205
    %v209 = vshrl.u32 2475754826, %v206
    %v210 = vor.u32 %v208, %v209
    %v211 = vshll.u32 2475754826, %v205
    %v212 = vshrl.u32 2131351028, %v206
    %v213 = vor.u32 %v211, %v212
    %v214 = vshll.u32 2131351028, %v205
    %v215 = vshrl.u32 2102212464, %v206
    %v216 = vor.u32 %v214, %v215
    %v217 = vshll.u32 2102212464, %v205
    %v218 = vshrl.u32 920167782, %v206
    %v219 = vor.u32 %v217, %v218
    %v220 = vshll.u32 920167782, %v205
    %v221 = vshrl.u32 1326507024, %v206
    %v222 = vor.u32 %v220, %v221
    %vm223 = vcmp.lt.s32.totalorder %v204, 1
    %vm224 = vcmp.lt.s32.totalorder %v204, 2
    %vm225 = vcmp.lt.s32.totalorder %v204, 3
    %vm226 = vcmp.lt.s32.totalorder %v204, 4
    %v227 = vsel %vm223, %v207, %v210
    %v228 = vsel %vm226, %v216, 2102212464
    %v229 = vsel %vm225, %v213, %v228
    %v230 = vsel %vm224, %v227, %v229
    %v231 = vsel %vm223, %v210, %v213
    %v232 = vsel %vm226, %v219, 920167782
    %v233 = vsel %vm225, %v216, %v232
    %v234 = vsel %vm224, %v231, %v233
    %v235 = vsel %vm223, %v213, %v216
    %v236 = vsel %vm226, %v222, 1326507024
    %v237 = vsel %vm225, %v219, %v236
    %v238 = vsel %vm224, %v235, %v237
    %v239 = vshll.u32 %v199, 8
    %v240 = vmul.u32.u64.compose %v239, %v238
    %v241 = vextract.low.u32 %v240
    %v242 = vextract.high.u32 %v240
    %v243 = vmul.u32.u64.compose %v239, %v234
    %v244 = vextract.low.u32 %v243
    %v245 = vextract.high.u32 %v243
    %v246 = vmul.u32 %v239, %v230
    %v247 = vadd.s32 %v242, %v244
    %vm248 = vc.u32 %v242, %v244
    %v249 = vadd.s32 %v245, 1
    %v250 = vsel %vm248, %v249, %v245
    %v251 = vadd.s32 %v246, %v250
    %v252 = vadd.s32 %v251, 536870912
    %v253 = vshrl.u32 %v252, 30
    %v254 = vshll.u32 %v253, 30
    %v255 = vsub.s32 %v251, %v254
    %vm256 = vcmp.lt.s32.totalorder %v255, 0
    %v257 = vsub.s32 0, %v255
    %v258 = vsel %vm256, %v257, %v255
    %v259 = vclz %v258
    %v260 = vsub.s32 %v259, 2
    %vm261 = vcmp.gt.s32.totalorder 0, %v260
    %v262 = vsel %vm261, 0, %v260
    %v263 = vsub.s32 32, %v262
    %v264 = vshll.u32 %v255, %v262
    %v265 = vshrl.u32 %v247, %v263
    %v266 = vor.u32 %v264, %v265
    %v267 = vsub.s32 4294967266, %v262
    %v268 = vadd.s32 %v267, 127
    %v269 = vshll.u32 %v268, 23
    %v270 = vor.u32 4788187, %v269
    %v271 = vand.u32 2147483647, %v270
    %v273 = vcvt.s32.f32 %v266
    %v274 = vmul.f32 %v273, %v271
    %v275 = vxor.u32 %v274, 2147483648
    %v276 = vsel %vm193, %v275, %v274
    %v277 = vsub.s32 4, %v253
    %v278 = vsel %vm193, %v277, %v253
    %v279 = vsel %vm192, %v84, %v276
    %v280 = vsel %vm192, 0, %v278
    %v281 = vcosq.f32.pop %v279
    %v282 = vsinq.f32.pop %v279
    %vm283 = vweird.f32 %v84
    %v284 = vadd.s32 %v280, 3
    %v285 = vand.u32 %v284, 3
    %vm286 = vcmp.lt.s32.totalorder %v285, 2
    %vm287 = vcmp.eq.s32.totalorder %v285, 0
    %v288 = vxor.u32 %v282, 2147483648
    %v289 = vsel %vm287, %v281, %v288
    %vm290 = vcmp.eq.s32.totalorder %v285, 2
    %v291 = vxor.u32 %v281, 2147483648
    %v292 = vsel %vm290, %v291, %v282
    %v293 = vsel %vm286, %v289, %v292
    %v294 = vsel %vm283, nan, %v293
    %v295 = vand.u32 2147483647, %v85
    %vm296 = vcmp.le.f32.partialorder %v295, 0.7853982
    %vm297 = vcmp.lt.s32.totalorder %v85, 0
    %v298 = vand.u32 %v85, 2139095040
    %v299 = vshrl.u32 %v298, 23
    %v300 = vsub.s32 %v299, 127
    %v301 = vand.u32 2147483647, %v85
    %v302 = vand.u32 %v301, 8388607
    %v303 = vor.u32 %v302, 8388608
    %v304 = vsub.s32 0, %v303
    %v305 = vadd.s32 %v300, 1
    %vm306 = vcmp.gt.s32.totalorder %v305, 0
    %v307 = vsel %vm306, %v305, 0
    %v308 = vshrl.u32 %v307, 5
    %v309 = vand.u32 %v307, 31
    %v310 = vsub.s32 32, %v309
    %v311 = vshrl.u32 683565275, %v310
    %v312 = vshll.u32 683565275, %v309
    %v313 = vshrl.u32 2475754826, %v310
    %v314 = vor.u32 %v312, %v313
    %v315 = vshll.u32 2475754826, %v309
    %v316 = vshrl.u32 2131351028, %v310
    %v317 = vor.u32 %v315, %v316
    %v318 = vshll.u32 2131351028, %v309
    %v319 = vshrl.u32 2102212464, %v310
    %v320 = vor.u32 %v318, %v319
    %v321 = vshll.u32 2102212464, %v309
    %v322 = vshrl.u32 920167782, %v310
    %v323 = vor.u32 %v321, %v322
    %v324 = vshll.u32 920167782, %v309
    %v325 = vshrl.u32 1326507024, %v310
    %v326 = vor.u32 %v324, %v325
    %vm327 = vcmp.lt.s32.totalorder %v308, 1
    %vm328 = vcmp.lt.s32.totalorder %v308, 2
    %vm329 = vcmp.lt.s32.totalorder %v308, 3
    %vm330 = vcmp.lt.s32.totalorder %v308, 4
    %v331 = vsel %vm327, %v311, %v314
    %v332 = vsel %vm330, %v320, 2102212464
    %v333 = vsel %vm329, %v317, %v332
    %v334 = vsel %vm328, %v331, %v333
    %v335 = vsel %vm327, %v314, %v317
    %v336 = vsel %vm330, %v323, 920167782
    %v337 = vsel %vm329, %v320, %v336
    %v338 = vsel %vm328, %v335, %v337
    %v339 = vsel %vm327, %v317, %v320
    %v340 = vsel %vm330, %v326, 1326507024
    %v341 = vsel %vm329, %v323, %v340
    %v342 = vsel %vm328, %v339, %v341
    %v343 = vshll.u32 %v303, 8
    %v344 = vmul.u32.u64.compose %v343, %v342
    %v345 = vextract.low.u32 %v344
    %v346 = vextract.high.u32 %v344
    %v347 = vmul.u32.u64.compose %v343, %v338
    %v348 = vextract.low.u32 %v347
    %v349 = vextract.high.u32 %v347
    %v350 = vmul.u32 %v343, %v334
    %v351 = vadd.s32 %v346, %v348
    %vm352 = vc.u32 %v346, %v348
    %v353 = vadd.s32 %v349, 1
    %v354 = vsel %vm352, %v353, %v349
    %v355 = vadd.s32 %v350, %v354
    %v356 = vadd.s32 %v355, 536870912
    %v357 = vshrl.u32 %v356, 30
    %v358 = vshll.u32 %v357, 30
    %v359 = vsub.s32 %v355, %v358
    %vm360 = vcmp.lt.s32.totalorder %v359, 0
    %v361 = vsub.s32 0, %v359
    %v362 = vsel %vm360, %v361, %v359
    %v363 = vclz %v362
    %v364 = vsub.s32 %v363, 2
    %vm365 = vcmp.gt.s32.totalorder 0, %v364
    %v366 = vsel %vm365, 0, %v364
    %v367 = vsub.s32 32, %v366
    %v368 = vshll.u32 %v359, %v366
    %v369 = vshrl.u32 %v351, %v367
    %v370 = vor.u32 %v368, %v369
    %v371 = vsub.s32 4294967266, %v366
    %v372 = vadd.s32 %v371, 127
    %v373 = vshll.u32 %v372, 23
    %v374 = vor.u32 4788187, %v373
    %v375 = vand.u32 2147483647, %v374
    %v377 = vcvt.s32.f32 %v370
    %v378 = vmul.f32 %v377, %v375
    %v379 = vxor.u32 %v378, 2147483648
    %v380 = vsel %vm297, %v379, %v378
    %v381 = vsub.s32 4, %v357
    %v382 = vsel %vm297, %v381, %v357
    %v383 = vsel %vm296, %v85, %v380
    %v384 = vsel %vm296, 0, %v382
    %v385 = vcosq.f32.pop %v383
    %v386 = vsinq.f32.pop %v383
    %vm387 = vweird.f32 %v85
    %v388 = vadd.s32 %v384, 3
    %v389 = vand.u32 %v388, 3
    %vm390 = vcmp.lt.s32.totalorder %v389, 2
    %vm391 = vcmp.eq.s32.totalorder %v389, 0
    %v392 = vxor.u32 %v386, 2147483648
    %v393 = vsel %vm391, %v385, %v392
    %vm394 = vcmp.eq.s32.totalorder %v389, 2
    %v395 = vxor.u32 %v385, 2147483648
    %v396 = vsel %vm394, %v395, %v386
    %v397 = vsel %vm390, %v393, %v396
    %v398 = vsel %vm387, nan, %v397
    %v399 = vand.u32 2147483647, %v86
    %vm400 = vcmp.le.f32.partialorder %v399, 0.7853982
    %vm401 = vcmp.lt.s32.totalorder %v86, 0
    %v402 = vand.u32 %v86, 2139095040
    %v403 = vshrl.u32 %v402, 23
    %v404 = vsub.s32 %v403, 127
    %v405 = vand.u32 2147483647, %v86
    %v406 = vand.u32 %v405, 8388607
    %v407 = vor.u32 %v406, 8388608
    %v408 = vsub.s32 0, %v407
    %v409 = vadd.s32 %v404, 1
    %vm410 = vcmp.gt.s32.totalorder %v409, 0
    %v411 = vsel %vm410, %v409, 0
    %v412 = vshrl.u32 %v411, 5
    %v413 = vand.u32 %v411, 31
    %v414 = vsub.s32 32, %v413
    %v415 = vshrl.u32 683565275, %v414
    %v416 = vshll.u32 683565275, %v413
    %v417 = vshrl.u32 2475754826, %v414
    %v418 = vor.u32 %v416, %v417
    %v419 = vshll.u32 2475754826, %v413
    %v420 = vshrl.u32 2131351028, %v414
    %v421 = vor.u32 %v419, %v420
    %v422 = vshll.u32 2131351028, %v413
    %v423 = vshrl.u32 2102212464, %v414
    %v424 = vor.u32 %v422, %v423
    %v425 = vshll.u32 2102212464, %v413
    %v426 = vshrl.u32 920167782, %v414
    %v427 = vor.u32 %v425, %v426
    %v428 = vshll.u32 920167782, %v413
    %v429 = vshrl.u32 1326507024, %v414
    %v430 = vor.u32 %v428, %v429
    %vm431 = vcmp.lt.s32.totalorder %v412, 1
    %vm432 = vcmp.lt.s32.totalorder %v412, 2
    %vm433 = vcmp.lt.s32.totalorder %v412, 3
    %vm434 = vcmp.lt.s32.totalorder %v412, 4
    %v435 = vsel %vm431, %v415, %v418
    %v436 = vsel %vm434, %v424, 2102212464
    %v437 = vsel %vm433, %v421, %v436
    %v438 = vsel %vm432, %v435, %v437
    %v439 = vsel %vm431, %v418, %v421
    %v440 = vsel %vm434, %v427, 920167782
    %v441 = vsel %vm433, %v424, %v440
    %v442 = vsel %vm432, %v439, %v441
    %v443 = vsel %vm431, %v421, %v424
    %v444 = vsel %vm434, %v430, 1326507024
    %v445 = vsel %vm433, %v427, %v444
    %v446 = vsel %vm432, %v443, %v445
    %v447 = vshll.u32 %v407, 8
    %v448 = vmul.u32.u64.compose %v447, %v446
    %v449 = vextract.low.u32 %v448
    %v450 = vextract.high.u32 %v448
    %v451 = vmul.u32.u64.compose %v447, %v442
    %v452 = vextract.low.u32 %v451
    %v453 = vextract.high.u32 %v451
    %v454 = vmul.u32 %v447, %v438
    %v455 = vadd.s32 %v450, %v452
    %vm456 = vc.u32 %v450, %v452
    %v457 = vadd.s32 %v453, 1
    %v458 = vsel %vm456, %v457, %v453
    %v459 = vadd.s32 %v454, %v458
    %v460 = vadd.s32 %v459, 536870912
    %v461 = vshrl.u32 %v460, 30
    %v462 = vshll.u32 %v461, 30
    %v463 = vsub.s32 %v459, %v462
    %vm464 = vcmp.lt.s32.totalorder %v463, 0
    %v465 = vsub.s32 0, %v463
    %v466 = vsel %vm464, %v465, %v463
    %v467 = vclz %v466
    %v468 = vsub.s32 %v467, 2
    %vm469 = vcmp.gt.s32.totalorder 0, %v468
    %v470 = vsel %vm469, 0, %v468
    %v471 = vsub.s32 32, %v470
    %v472 = vshll.u32 %v463, %v470
    %v473 = vshrl.u32 %v455, %v471
    %v474 = vor.u32 %v472, %v473
    %v475 = vsub.s32 4294967266, %v470
    %v476 = vadd.s32 %v475, 127
    %v477 = vshll.u32 %v476, 23
    %v478 = vor.u32 4788187, %v477
    %v479 = vand.u32 2147483647, %v478
    %v481 = vcvt.s32.f32 %v474
    %v482 = vmul.f32 %v481, %v479
    %v483 = vxor.u32 %v482, 2147483648
    %v484 = vsel %vm401, %v483, %v482
    %v485 = vsub.s32 4, %v461
    %v486 = vsel %vm401, %v485, %v461
    %v487 = vsel %vm400, %v86, %v484
    %v488 = vsel %vm400, 0, %v486
    %v489 = vcosq.f32.pop %v487
    %v490 = vsinq.f32.pop %v487
    %vm491 = vweird.f32 %v86
    %v492 = vadd.s32 %v488, 3
    %v493 = vand.u32 %v492, 3
    %vm494 = vcmp.lt.s32.totalorder %v493, 2
    %vm495 = vcmp.eq.s32.totalorder %v493, 0
    %v496 = vxor.u32 %v490, 2147483648
    %v497 = vsel %vm495, %v489, %v496
    %vm498 = vcmp.eq.s32.totalorder %v493, 2
    %v499 = vxor.u32 %v489, 2147483648
    %v500 = vsel %vm498, %v499, %v490
    %v501 = vsel %vm494, %v497, %v500
    %v502 = vsel %vm491, nan, %v501
    %503 = vst [vmem:[#allocation2] sm:$0xff] %v190
    %504 = vst [vmem:[#allocation2 + $0x8] sm:$0xff] %v294
    %505 = vst [vmem:[#allocation2 + $0x10] sm:$0xff] %v398
    %506 = vst [vmem:[#allocation2 + $0x18] sm:$0xff] %v502
    // Predicated region
    $region14: #{tpu_custom_call.1} parent=1 // pred_check
      _
    $region15: #{tpu_custom_call.1} parent=1 // pred_check_branch
      %508 = sbr.rel (0) target = $region17
    $region16: #{tpu_custom_call.1} parent=1 // pred_region
      %s510 = ssub.s32 512, 512
      %511 = vsyncadd [#allocation3], %s510
      %s512 = sshll.u32 [#allocation2], 4
      %s513 = int_to_ptr.vmem [resolvable:$true] %s512
      %518 = dma.vmem_to_hbm [thread:$0]  %s513, 512, %s3, [#allocation3], 128, 128, 8
    $region17: #{tpu_custom_call.1} parent=1 // pred_fallthru
      _
    // Predicated region
    $region18: #{tpu_custom_call.1} parent=1 // pred_check
      _
    $region19: #{tpu_custom_call.1} parent=1 // pred_check_branch
      %520 = sbr.rel (0) target = $region21
    $region20: #{tpu_custom_call.1} parent=1 // pred_region
      %521 = dma.done [#allocation3], 512
    $region21: #{tpu_custom_call.1} parent=1 // pred_fallthru
      _
    %522 = vsyncpa [#allocation3], 1

</llo_original>
